<compile_context>
chip_gen: v6e
topology: v6e:2x2x1
jax: 0.10.0
libtpu: 0.0.40
codegen_flags: <defaults>
</compile_context>

<pallas_src>
import functools

import jax
import jax.numpy as jnp
from jax import lax
from jax.experimental import pallas as pl
from jax.experimental.pallas import tpu as pltpu


def _round_up(v, m):
    return ((v + m - 1) // m) * m


def double_attention_kernel(x_ref, wABV_ref, bABV_ref, wtpg_ref, btpg_ref,
                            wW_ref, bW_ref, o_ref, *,
                            c_m_p, c_n_p, e_p, c_n, l_valid):
    f32 = jnp.float32
    wABV = wABV_ref[...]                 # (c_m_p + 2*c_n_p, C)   compute dtype
    bABV = bABV_ref[...]                 # (c_m_p + 2*c_n_p, 1)   f32
    wtpg = wtpg_ref[...]                 # (3*e_p, c_m_p)         f32
    btpg = btpg_ref[...]                 # (3*e_p, 1)             f32
    wW = wW_ref[...]                     # (c_m_p, e_p)           f32
    bW = bW_ref[...]                     # (c_m_p, 1)             f32

    block_b = x_ref.shape[0]
    l_pad = x_ref.shape[-1]
    inv_n = 1.0 / float(c_n)             # Rs_GCN divides by true c_n

    # --- masks hoisted out of the (possibly unrolled) per-batch loop ---------
    lane_mask = None
    if l_pad != l_valid:                 # static: mask padded lanes out of softmax
        lane = lax.broadcasted_iota(jnp.int32, (2 * c_n_p, l_pad), 1)
        lane_mask = jnp.where(lane < l_valid, f32(0.0), f32(-1e30))
    row_mask = None
    col_mask = None
    if c_n_p != c_n:                     # static: zero contributions of padded c_n rows
        sub = lax.broadcasted_iota(jnp.int32, (2 * c_n_p, 1), 0)
        row_mask = ((sub % c_n_p) < c_n).astype(f32)
        col = lax.broadcasted_iota(jnp.int32, (1, c_n_p), 1)
        col_mask = (col < c_n).astype(f32)

    def per_batch(i, carry):
        x = x_ref[i]                                             # (C, L_pad)

        # Fused 1x1 convs A/B/V: one MXU matmul + lane-broadcast bias add.
        proj = jnp.dot(wABV, x, preferred_element_type=f32) + bABV
        A = proj[:c_m_p]                                         # (c_m_p, L_pad)
        logits = proj[c_m_p:]                                    # (2*c_n_p, L_pad)
        if lane_mask is not None:
            logits = logits + lane_mask

        # Joint softmax over L for attention_maps (B) and attention_vectors (V).
        m = jnp.max(logits, axis=-1, keepdims=True)
        e = jnp.exp(logits - m)
        s = jnp.sum(e, axis=-1, keepdims=True)
        r = pl.reciprocal(s, approx=True)        # EUP slot (otherwise idle)
        r = r * (2.0 - s * r)                    # one Newton step -> f32-level accuracy
        sm = e * r                                               # (2*c_n_p, L_pad)
        if row_mask is not None:
            sm = sm * row_mask                   # zero padded c_n rows
        sB = sm[:c_n_p]                          # attention_maps
        sV = sm[c_n_p:]                          # attention_vectors

        # global_descriptors = A @ sB^T -> (c_m_p, c_n_p)
        gd = lax.dot_general(A, sB, (((1,), (1,)), ((), ())),
                             preferred_element_type=f32)

        # ---- Rs_GCN non-local block on gd: fused theta/phi/g matmul --------
        tpg = jnp.dot(wtpg, gd, preferred_element_type=f32) + btpg   # (3*e_p, c_n_p)
        if col_mask is not None:
            tpg = tpg * col_mask                 # keep GCN biases out of padded cols
        theta = tpg[:e_p]
        phi = tpg[e_p:2 * e_p]
        g = tpg[2 * e_p:]

        # R[n, k] = (1/N) * sum_e theta[e, n] * phi[e, k]
        R = lax.dot_general(theta, phi, (((0,), (0,)), ((), ())),
                            preferred_element_type=f32) * inv_n      # (c_n_p, c_n_p)
        # yT[e, n] = sum_k g[e, k] * R[n, k]
        yT = lax.dot_general(g, R, (((1,), (1,)), ((), ())),
                             preferred_element_type=f32)             # (e_p, c_n_p)
        Wy = jnp.dot(wW, yT, preferred_element_type=f32) + bW        # (c_m_p, c_n_p)
        gd_star = Wy + gd                                            # residual

        # tmpZ = gd_star @ attention_vectors -> (c_m_p, L_pad)
        z = jnp.dot(gd_star.astype(wABV.dtype), sV.astype(wABV.dtype),
                    preferred_element_type=f32)
        o_ref[i] = z.astype(o_ref.dtype)
        return carry

    if block_b == 1:
        per_batch(0, 0)
    else:
        # Interleave a few independent chains to hide tiny-matmul latency,
        # but cap the unroll so live ranges fit the 64-vreg file (no spills).
        lax.fori_loop(0, block_b, per_batch, 0, unroll=min(block_b, 4))


def double_attention(x, params, *, block_b=None,
                     compute_dtype=jnp.bfloat16, out_dtype=jnp.float32):
    """x: (B, C, H, W).  Returns (B, c_m, H, W) in `out_dtype` (NCHW, like PyTorch).

    compute_dtype=bfloat16 (default) halves the dominant HBM read of x and
    doubles MXU rate on the two L-sized matmuls; softmax / GCN math stays f32.
    Use compute_dtype=jnp.float32 for strict 1e-4 parity with the reference.
    """
    B, C, H, W = x.shape
    L = H * W
    L_pad = _round_up(L, 128)                # lane-dense last dim
    c_m = params["wA"].shape[0]
    c_n = params["wB"].shape[0]
    embed = params["wth"].shape[0]
    # Sublane-aligned sizes so all in-kernel static slices are free sub-views.
    c_m_p = _round_up(c_m, 8)
    c_n_p = _round_up(c_n, 8)
    e_p = _round_up(embed, 8)

    def pad2(a, rows, cols):
        return jnp.pad(a, ((0, rows - a.shape[0]), (0, cols - a.shape[1])))

    # Stacked conv weights; biases are separate and added in-kernel.
    wABV = jnp.concatenate([
        pad2(params["wA"], c_m_p, C),
        pad2(params["wB"], c_n_p, C),
        pad2(params["wV"], c_n_p, C),
    ], axis=0).astype(compute_dtype)                               # (c_m_p+2c_n_p, C)
    bABV = jnp.concatenate([
        pad2(params["bA"], c_m_p, 1),
        pad2(params["bB"], c_n_p, 1),
        pad2(params["bV"], c_n_p, 1),
    ], axis=0).astype(jnp.float32)                                 # (c_m_p+2c_n_p, 1)

    wtpg = jnp.concatenate([
        pad2(params["wth"], e_p, c_m_p),
        pad2(params["wph"], e_p, c_m_p),
        pad2(params["wg"], e_p, c_m_p),
    ], axis=0).astype(jnp.float32)                                 # (3e_p, c_m_p)
    btpg = jnp.concatenate([
        pad2(params["bth"], e_p, 1),
        pad2(params["bph"], e_p, 1),
        pad2(params["bg"], e_p, 1),
    ], axis=0).astype(jnp.float32)                                 # (3e_p, 1)
    wW = pad2(params["wW"], c_m_p, e_p).astype(jnp.float32)        # (c_m_p, e_p)
    bW = pad2(params["bW"], c_m_p, 1).astype(jnp.float32)          # (c_m_p, 1)

    # x: free reshape; pad (zero-fill) only when L is not lane-aligned; cast
    # only when compute dtype differs.  No ones-row concat, no forced copy.
    x_flat = x.reshape(B, C, L)
    if L_pad != L:
        x_flat = jnp.pad(x_flat, ((0, 0), (0, 0), (0, L_pad - L)))
    if x_flat.dtype != compute_dtype:
        x_flat = x_flat.astype(compute_dtype)                      # (B, C, L_pad)

    in_bytes = jnp.dtype(compute_dtype).itemsize
    out_bytes = jnp.dtype(out_dtype).itemsize
    # Double-buffered per-batch block footprint (input + output).
    per_b = 2 * (C * L_pad * in_bytes + c_m_p * L_pad * out_bytes)
    weight_bytes = sum(int(a.size) * a.dtype.itemsize
                       for a in (wABV, bABV, wtpg, btpg, wW, bW))

    if block_b is None:
        budget = 24 << 20            # conservative across v5e/v6e/v7x scoped-VMEM
        cap = max(1, int(budget // max(per_b, 1)))
        divisors = [d for d in range(1, B + 1) if B % d == 0]
        # keep grid >= 2 whenever B >= 2 so both v7x TensorCores get work
        cands = [d for d in divisors if d <= cap and (B < 2 or B // d >= 2)]
        block_b = max(cands) if cands else 1
    assert B % block_b == 0, (B, block_b)

    vmem_limit = int(min(48 << 20,
                         max(16 << 20,
                             per_b * block_b + 2 * weight_bytes + (4 << 20))))

    kern = functools.partial(double_attention_kernel,
                             c_m_p=c_m_p, c_n_p=c_n_p, e_p=e_p,
                             c_n=c_n, l_valid=L)

    # NOTE: for very large feature maps add an L-tiling grid axis (two-pass or
    # online softmax + gd accumulation); unnecessary at these shapes where the
    # full-L block is a few KiB.  pipeline_mode=pl.Buffered(3) on the x spec is
    # a further knob for v7x's faster HBM if the grid is long.
    out = pl.pallas_call(
        kern,
        out_shape=jax.ShapeDtypeStruct((B, c_m_p, L_pad), out_dtype),
        grid_spec=pltpu.PrefetchScalarGridSpec(
            num_scalar_prefetch=0,
            grid=(B // block_b,),
            in_specs=[
                pl.BlockSpec((block_b, C, L_pad), lambda b: (b, 0, 0)),
                pl.BlockSpec(wABV.shape, lambda b: (0, 0)),
                pl.BlockSpec(bABV.shape, lambda b: (0, 0)),
                pl.BlockSpec(wtpg.shape, lambda b: (0, 0)),
                pl.BlockSpec(btpg.shape, lambda b: (0, 0)),
                pl.BlockSpec(wW.shape, lambda b: (0, 0)),
                pl.BlockSpec(bW.shape, lambda b: (0, 0)),
            ],
            out_specs=pl.BlockSpec((block_b, c_m_p, L_pad), lambda b: (b, 0, 0)),
        ),
        compiler_params=pltpu.CompilerParams(
            dimension_semantics=("parallel",),      # batch axis is independent
            vmem_limit_bytes=vmem_limit),
    )(x_flat, wABV, bABV, wtpg, btpg, wW, bW)

    if c_m_p != c_m or L_pad != L:
        out = out[:, :c_m, :L]
    return out.reshape(B, c_m, H, W)


def reference(x, p):
    """Pure-JAX reference mirroring the PyTorch forward (f32)."""
    B, C, H, W = x.shape
    L = H * W
    xf = x.reshape(B, C, L)
    A = jnp.einsum("mc,bcl->bml", p["wA"], xf) + p["bA"][None]
    Bf = jnp.einsum("nc,bcl->bnl", p["wB"], xf) + p["bB"][None]
    Vf = jnp.einsum("nc,bcl->bnl", p["wV"], xf) + p["bV"][None]
    sB = jax.nn.softmax(Bf, axis=-1)
    sV = jax.nn.softmax(Vf, axis=-1)
    gd = jnp.einsum("bml,bnl->bmn", A, sB)                          # (B, c_m, c_n)
    theta = jnp.einsum("em,bmn->ben", p["wth"], gd) + p["bth"][None]
    phi = jnp.einsum("em,bmn->ben", p["wph"], gd) + p["bph"][None]
    g = jnp.einsum("em,bmn->ben", p["wg"], gd) + p["bg"][None]
    R = jnp.einsum("ben,bek->bnk", theta, phi) / gd.shape[-1]
    yT = jnp.einsum("bnk,bek->ben", R, g)
    Wy = jnp.einsum("me,ben->bmn", p["wW"], yT) + p["bW"][None]
    gd_star = Wy + gd
    Z = jnp.einsum("bmn,bnl->bml", gd_star, sV)
    return Z.reshape(B, gd.shape[1], H, W)


def make_params(key, in_channels, c_m, c_n, embed_size):
    assert embed_size == c_m, "GCN operates on c_m channels -> embed_size must equal c_m"
    ks = jax.random.split(key, 14)

    def w(k, shape, scale=0.1):
        return (scale * jax.random.normal(k, shape)).astype(jnp.float32)

    return {
        "wA": w(ks[0], (c_m, in_channels)), "bA": w(ks[1], (c_m, 1)),
        "wB": w(ks[2], (c_n, in_channels)), "bB": w(ks[3], (c_n, 1)),
        "wV": w(ks[4], (c_n, in_channels)), "bV": w(ks[5], (c_n, 1)),
        "wth": w(ks[6], (embed_size, c_m)), "bth": w(ks[7], (embed_size, 1)),
        "wph": w(ks[8], (embed_size, c_m)), "bph": w(ks[9], (embed_size, 1)),
        "wg": w(ks[10], (embed_size, c_m)), "bg": w(ks[11], (embed_size, 1)),
        "wW": w(ks[12], (c_m, embed_size)), "bW": w(ks[13], (c_m, 1)),
    }


if __name__ == "__main__":
    B, C, H, W = 2, 4, 16, 16
    c_m, c_n, embed_size = 32, 8, 32   # reconstruct=False

    key = jax.random.PRNGKey(0)
    kx, kp = jax.random.split(key)
    x = jax.random.normal(kx, (B, C, H, W), dtype=jnp.float32)
    params = make_params(kp, C, c_m, c_n, embed_size)

    ref = reference(x, params)

    # Strict parity path (f32 compute).
    out_f32 = jax.block_until_ready(
        double_attention(x, params, compute_dtype=jnp.float32))
    assert out_f32.shape == (B, c_m, H, W), out_f32.shape
    assert jnp.allclose(out_f32, ref, rtol=1e-4, atol=1e-4), \
        float(jnp.max(jnp.abs(out_f32 - ref)))

    # Default fast path (bf16 compute, f32 accumulation) with loose tolerance.
    out_bf16 = jax.block_until_ready(double_attention(x, params))
    assert out_bf16.shape == (B, c_m, H, W), out_bf16.shape
    assert jnp.allclose(out_bf16, ref, rtol=5e-2, atol=5e-2), \
        float(jnp.max(jnp.abs(out_bf16 - ref)))

    print("KERNEL_OK")
</pallas_src>

<mosaic_0001>
module attributes {stable_mosaic.version = 11 : i64} {
  func.func @double_attention_kernel(%arg0: i32, %arg1: memref<1x4x256xf32, #tpu.memory_space<vmem>>, %arg2: memref<48x4xf32, #tpu.memory_space<vmem>>, %arg3: memref<48x1xf32, #tpu.memory_space<vmem>>, %arg4: memref<96x32xf32, #tpu.memory_space<vmem>>, %arg5: memref<96x1xf32, #tpu.memory_space<vmem>>, %arg6: memref<32x32xf32, #tpu.memory_space<vmem>>, %arg7: memref<32x1xf32, #tpu.memory_space<vmem>>, %arg8: memref<1x32x256xf32, #tpu.memory_space<vmem>>) attributes {dimension_semantics = [#tpu.dimension_semantics<parallel>], iteration_bounds = array<i64: 2>, scalar_prefetch = 0 : i64, scratch_operands = 0 : i64, tpu.core_type = #tpu.core_type<tc>, window_params = [{transform_indices = @transform_0, window_bounds = array<i64: 1, 4, 256>}, {pipeline_mode = #tpu.pipeline_mode<synchronous>, transform_indices = @transform_1, window_bounds = array<i64: 48, 4>}, {pipeline_mode = #tpu.pipeline_mode<synchronous>, transform_indices = @transform_2, window_bounds = array<i64: 48, 1>}, {pipeline_mode = #tpu.pipeline_mode<synchronous>, transform_indices = @transform_3, window_bounds = array<i64: 96, 32>}, {pipeline_mode = #tpu.pipeline_mode<synchronous>, transform_indices = @transform_4, window_bounds = array<i64: 96, 1>}, {pipeline_mode = #tpu.pipeline_mode<synchronous>, transform_indices = @transform_5, window_bounds = array<i64: 32, 32>}, {pipeline_mode = #tpu.pipeline_mode<synchronous>, transform_indices = @transform_6, window_bounds = array<i64: 32, 1>}, {transform_indices = @transform_7, window_bounds = array<i64: 1, 32, 256>}]} {
    %c0 = arith.constant 0 : index
    %c0_0 = arith.constant 0 : index
    %0 = vector.load %arg2[%c0, %c0_0] : memref<48x4xf32, #tpu.memory_space<vmem>>, vector<48x4xf32>
    %c0_1 = arith.constant 0 : index
    %c0_2 = arith.constant 0 : index
    %1 = vector.load %arg3[%c0_1, %c0_2] : memref<48x1xf32, #tpu.memory_space<vmem>>, vector<48x1xf32>
    %c0_3 = arith.constant 0 : index
    %c0_4 = arith.constant 0 : index
    %2 = vector.load %arg4[%c0_3, %c0_4] : memref<96x32xf32, #tpu.memory_space<vmem>>, vector<96x32xf32>
    %c0_5 = arith.constant 0 : index
    %c0_6 = arith.constant 0 : index
    %3 = vector.load %arg5[%c0_5, %c0_6] : memref<96x1xf32, #tpu.memory_space<vmem>>, vector<96x1xf32>
    %c0_7 = arith.constant 0 : index
    %c0_8 = arith.constant 0 : index
    %4 = vector.load %arg6[%c0_7, %c0_8] : memref<32x32xf32, #tpu.memory_space<vmem>>, vector<32x32xf32>
    %c0_9 = arith.constant 0 : index
    %c0_10 = arith.constant 0 : index
    %5 = vector.load %arg7[%c0_9, %c0_10] : memref<32x1xf32, #tpu.memory_space<vmem>>, vector<32x1xf32>
    %c0_11 = arith.constant 0 : index
    %c0_12 = arith.constant 0 : index
    %c0_13 = arith.constant 0 : index
    %6 = vector.load %arg1[%c0_11, %c0_12, %c0_13] : memref<1x4x256xf32, #tpu.memory_space<vmem>>, vector<1x4x256xf32>
    %7 = vector.shape_cast %6 : vector<1x4x256xf32> to vector<4x256xf32>
    %cst = arith.constant dense<0.000000e+00> : vector<48x256xf32>
    %8 = tpu.matmul %0, %7, %cst {dimension_numbers = #tpu.dot_dimension_numbers<[1], [0], [0], [1], [0, 0, 1, 1], [], []>} : vector<48x4xf32>, vector<4x256xf32>, vector<48x256xf32> -> vector<48x256xf32>
    %9 = vector.broadcast %1 : vector<48x1xf32> to vector<48x256xf32>
    %10 = arith.addf %8, %9 : vector<48x256xf32>
    %11 = vector.extract_strided_slice %10 {offsets = [0, 0], sizes = [32, 256], strides = [1, 1]} : vector<48x256xf32> to vector<32x256xf32>
    %12 = vector.extract_strided_slice %10 {offsets = [32, 0], sizes = [16, 256], strides = [1, 1]} : vector<48x256xf32> to vector<16x256xf32>
    %cst_14 = arith.constant dense<0xFF800000> : vector<16xf32>
    %13 = vector.multi_reduction <maximumf>, %12, %cst_14 [1] : vector<16x256xf32> to vector<16xf32>
    %14 = vector.shape_cast %13 : vector<16xf32> to vector<16x1xf32>
    %15 = vector.broadcast %14 : vector<16x1xf32> to vector<16x256xf32>
    %16 = arith.subf %12, %15 : vector<16x256xf32>
    %17 = math.exp %16 : vector<16x256xf32>
    %cst_15 = arith.constant dense<0.000000e+00> : vector<16xf32>
    %18 = vector.multi_reduction <add>, %17, %cst_15 [1] : vector<16x256xf32> to vector<16xf32>
    %19 = vector.shape_cast %18 : vector<16xf32> to vector<16x1xf32>
    %20 = tpu.reciprocal %19 {approx = true} : vector<16x1xf32> -> vector<16x1xf32>
    %21 = arith.mulf %19, %20 : vector<16x1xf32>
    %cst_16 = arith.constant 2.000000e+00 : f32
    %22 = vector.broadcast %cst_16 : f32 to vector<16x1xf32>
    %23 = arith.subf %22, %21 : vector<16x1xf32>
    %24 = arith.mulf %20, %23 : vector<16x1xf32>
    %25 = vector.broadcast %24 : vector<16x1xf32> to vector<16x256xf32>
    %26 = arith.mulf %17, %25 : vector<16x256xf32>
    %27 = vector.extract_strided_slice %26 {offsets = [0, 0], sizes = [8, 256], strides = [1, 1]} : vector<16x256xf32> to vector<8x256xf32>
    %28 = vector.extract_strided_slice %26 {offsets = [8, 0], sizes = [8, 256], strides = [1, 1]} : vector<16x256xf32> to vector<8x256xf32>
    %cst_17 = arith.constant dense<0.000000e+00> : vector<32x8xf32>
    %29 = tpu.matmul %11, %27, %cst_17 {dimension_numbers = #tpu.dot_dimension_numbers<[1], [1], [0], [0], [0, 0, 1, 0], [], []>} : vector<32x256xf32>, vector<8x256xf32>, vector<32x8xf32> -> vector<32x8xf32>
    %cst_18 = arith.constant dense<0.000000e+00> : vector<96x8xf32>
    %30 = tpu.matmul %2, %29, %cst_18 {dimension_numbers = #tpu.dot_dimension_numbers<[1], [0], [0], [1], [0, 0, 1, 1], [], []>} : vector<96x32xf32>, vector<32x8xf32>, vector<96x8xf32> -> vector<96x8xf32>
    %31 = vector.broadcast %3 : vector<96x1xf32> to vector<96x8xf32>
    %32 = arith.addf %30, %31 : vector<96x8xf32>
    %33 = vector.extract_strided_slice %32 {offsets = [0, 0], sizes = [32, 8], strides = [1, 1]} : vector<96x8xf32> to vector<32x8xf32>
    %34 = vector.extract_strided_slice %32 {offsets = [32, 0], sizes = [32, 8], strides = [1, 1]} : vector<96x8xf32> to vector<32x8xf32>
    %35 = vector.extract_strided_slice %32 {offsets = [64, 0], sizes = [32, 8], strides = [1, 1]} : vector<96x8xf32> to vector<32x8xf32>
    %cst_19 = arith.constant dense<0.000000e+00> : vector<8x8xf32>
    %36 = tpu.matmul %33, %34, %cst_19 {dimension_numbers = #tpu.dot_dimension_numbers<[0], [0], [1], [1], [0, 1, 1, 1], [], []>} : vector<32x8xf32>, vector<32x8xf32>, vector<8x8xf32> -> vector<8x8xf32>
    %cst_20 = arith.constant 1.250000e-01 : f32
    %37 = vector.broadcast %cst_20 : f32 to vector<8x8xf32>
    %38 = arith.mulf %36, %37 : vector<8x8xf32>
    %cst_21 = arith.constant dense<0.000000e+00> : vector<32x8xf32>
    %39 = tpu.matmul %35, %38, %cst_21 {dimension_numbers = #tpu.dot_dimension_numbers<[1], [1], [0], [0], [0, 0, 1, 0], [], []>} : vector<32x8xf32>, vector<8x8xf32>, vector<32x8xf32> -> vector<32x8xf32>
    %cst_22 = arith.constant dense<0.000000e+00> : vector<32x8xf32>
    %40 = tpu.matmul %4, %39, %cst_22 {dimension_numbers = #tpu.dot_dimension_numbers<[1], [0], [0], [1], [0, 0, 1, 1], [], []>} : vector<32x32xf32>, vector<32x8xf32>, vector<32x8xf32> -> vector<32x8xf32>
    %41 = vector.broadcast %5 : vector<32x1xf32> to vector<32x8xf32>
    %42 = arith.addf %40, %41 : vector<32x8xf32>
    %43 = arith.addf %42, %29 : vector<32x8xf32>
    %cst_23 = arith.constant dense<0.000000e+00> : vector<32x256xf32>
    %44 = tpu.matmul %43, %28, %cst_23 {dimension_numbers = #tpu.dot_dimension_numbers<[1], [0], [0], [1], [0, 0, 1, 1], [], []>} : vector<32x8xf32>, vector<8x256xf32>, vector<32x256xf32> -> vector<32x256xf32>
    %c0_24 = arith.constant 0 : index
    %c0_25 = arith.constant 0 : index
    %c0_26 = arith.constant 0 : index
    %45 = vector.load %arg8[%c0_24, %c0_25, %c0_26] : memref<1x32x256xf32, #tpu.memory_space<vmem>>, vector<1x32x256xf32>
    %46 = vector.shape_cast %45 : vector<1x32x256xf32> to vector<32x256xf32>
    %47 = vector.shape_cast %44 : vector<32x256xf32> to vector<1x32x256xf32>
    tpu.vector_store %arg8[%c0_24, %c0_25, %c0_26], %47 {strides = array<i32>} : memref<1x32x256xf32, #tpu.memory_space<vmem>>, vector<1x32x256xf32>,
    return
  }
  func.func @transform_0(%arg0: i32) -> (i32, i32, i32) {
    %c0_i32 = arith.constant 0 : i32
    %c0_i32_0 = arith.constant 0 : i32
    %c0_i32_1 = arith.constant 0 : i32
    return %arg0, %c0_i32, %c0_i32_0 : i32, i32, i32
  }
  func.func @transform_1(%arg0: i32) -> (i32, i32) {
    %c0_i32 = arith.constant 0 : i32
    %c0_i32_0 = arith.constant 0 : i32
    %c0_i32_1 = arith.constant 0 : i32
    return %c0_i32, %c0_i32_0 : i32, i32
  }
  func.func @transform_2(%arg0: i32) -> (i32, i32) {
    %c0_i32 = arith.constant 0 : i32
    %c0_i32_0 = arith.constant 0 : i32
    %c0_i32_1 = arith.constant 0 : i32
    return %c0_i32, %c0_i32_0 : i32, i32
  }
  func.func @transform_3(%arg0: i32) -> (i32, i32) {
    %c0_i32 = arith.constant 0 : i32
    %c0_i32_0 = arith.constant 0 : i32
    %c0_i32_1 = arith.constant 0 : i32
    return %c0_i32, %c0_i32_0 : i32, i32
  }
  func.func @transform_4(%arg0: i32) -> (i32, i32) {
    %c0_i32 = arith.constant 0 : i32
    %c0_i32_0 = arith.constant 0 : i32
    %c0_i32_1 = arith.constant 0 : i32
    return %c0_i32, %c0_i32_0 : i32, i32
  }
  func.func @transform_5(%arg0: i32) -> (i32, i32) {
    %c0_i32 = arith.constant 0 : i32
    %c0_i32_0 = arith.constant 0 : i32
    %c0_i32_1 = arith.constant 0 : i32
    return %c0_i32, %c0_i32_0 : i32, i32
  }
  func.func @transform_6(%arg0: i32) -> (i32, i32) {
    %c0_i32 = arith.constant 0 : i32
    %c0_i32_0 = arith.constant 0 : i32
    %c0_i32_1 = arith.constant 0 : i32
    return %c0_i32, %c0_i32_0 : i32, i32
  }
  func.func @transform_7(%arg0: i32) -> (i32, i32, i32) {
    %c0_i32 = arith.constant 0 : i32
    %c0_i32_0 = arith.constant 0 : i32
    %c0_i32_1 = arith.constant 0 : i32
    return %arg0, %c0_i32, %c0_i32_0 : i32, i32, i32
  }
}

</mosaic_0001>

<llo_original>
// kernel: tpu_custom_call.1
$region0: #{tpu_custom_call.1}
  #allocation0 [shape = 'u32[]', space=smem, size = 0x4, offset = 0x4, fixed_abs, tag = 'smem constant byte address 0x4 - core index']
  #allocation1 [shape = 'u32[144,128]{1,0:T(1,128)}', space=vmem, size = 0x12000, scoped, tag = 'internal scratch']
  %s0 = inlined_call_operand.vmem [shape: f32[2,4,256], index: 0, kind: input, shape index: {}]
  %s1 = inlined_call_operand.vmem [shape: f32[48,4], index: 1, kind: input, shape index: {}]
  %s2 = inlined_call_operand.vmem [shape: f32[48,1], index: 2, kind: input, shape index: {}]
  %s3 = inlined_call_operand.vmem [shape: f32[96,32], index: 3, kind: input, shape index: {}]
  %s4 = inlined_call_operand.vmem [shape: f32[96,1], index: 4, kind: input, shape index: {}]
  %s5 = inlined_call_operand.vmem [shape: f32[32,32], index: 5, kind: input, shape index: {}]
  %s6 = inlined_call_operand.vmem [shape: f32[32,1], index: 6, kind: input, shape index: {}]
  %s7 = inlined_call_operand.hbm [shape: f32[2,32,256], index: 7, kind: output, shape index: {}]
  %s8 = sld [smem:[#allocation0]]
  $region61: #{tpu_custom_call.1} parent=0
    _
  %s10 = ssub.s32 1, %s8
  %s11 = scalar_select 0, %s10, %s8
  $region1: #{tpu_custom_call.1} parent=0
    #allocation2 [shape = 'u8[65536]{0}', space=vmem, size = 0x10000, scoped, tag = 'output window, operand 0']
    #allocation3 [shape = 's32[2]{0}', space=sflag, size = 0x8, scoped, tag = 'scoped memory for tpu_custom_call.1']
    %12 = vsyncpa [#allocation3], 0
    %s13 = scalar_lea.sflag [#allocation3], 1
    %14 = vsyncpa %s13, 0
    loop: start=0, step=1, limit=4
    $region2: #{tpu_custom_call.1} parent=1 // loop_pre_header
      _
    $region3: #{tpu_custom_call.1} parent=1 // loop_header
      %s16 = sphi 0, %s20
      %p17 = scmp.ge.s32.totalorder %s16, 4
      %s26 = sphi 0, %s28
      %s29 = sphi 0, %s26
      %s30 = sphi 0, %s29
      %s46 = sphi 0, %s30
      %s50 = sphi 0, %s50
      %s52 = sphi 0, %s50
      %s53 = sphi 0, %s52
      %s67 = sphi 0, %s53
      %s71 = sphi 0, %s71
      %s73 = sphi 0, %s71
      %s74 = sphi 0, %s73
      %s88 = sphi 0, %s74
      %s92 = sphi 0, %s92
      %s94 = sphi 0, %s92
      %s95 = sphi 0, %s94
      %s109 = sphi 0, %s95
      %s113 = sphi 0, %s113
      %s115 = sphi 0, %s113
      %s116 = sphi 0, %s115
      %s130 = sphi 0, %s116
      %s134 = sphi 0, %s134
      %s136 = sphi 0, %s134
      %s137 = sphi 0, %s136
      %s151 = sphi 0, %s137
      %s155 = sphi 0, %s155
      %s157 = sphi 0, %s155
      %s158 = sphi 0, %s157
      %s172 = sphi 0, %s158
      %s178 = sphi 0, %s180
      %s181 = sphi 0, %s178
      %s182 = sphi 0, %s181
      %s198 = sphi 0, %s182
    $region4: #{tpu_custom_call.1} parent=1 // loop_header_branch
      %19 = sbr.rel (%p17) target = $region8
    $region5: #{tpu_custom_call.1} parent=1 // loop_body
      %s21 = ssub.s32 %s16, 1
      %s22 = ssub.s32 %s16, 2
      %s23 = sadd.s32 %s16, 1
      %s24 = ssub.s32 %s16, %s23
      %p25 = scmp.eq.s32.totalorder %s24, 0
      %s27 = sadd.s32 %s26, 1
      %s28 = scalar_select %p25, %s26, %s27
      %p31 = pneg %p25
      %p32 = scmp.eq.s32.totalorder %s16, 1
      %p33 = por %p31, %p32
      %p34 = scmp.ne.s32.totalorder %s26, %s29
      %p35 = scmp.eq.s32.totalorder %s16, 0
      %p36 = por %p34, %p35
      %p37 = scmp.ne.s32.totalorder %s26, %s29
      %p38 = scmp.eq.s32.totalorder %s21, 1
      %p39 = por %p37, %p38
      %p40 = scmp.ne.s32.totalorder %s29, %s30
      %p41 = scmp.eq.s32.totalorder %s21, 0
      %p42 = por %p40, %p41
      %p43 = scmp.ne.s32.totalorder %s29, %s30
      %p44 = scmp.eq.s32.totalorder %s22, 1
      %p45 = por %p43, %p44
      %p47 = scmp.ne.s32.totalorder %s30, %s46
      %p48 = scmp.eq.s32.totalorder %s22, 0
      %p49 = por %p47, %p48
      %s51 = sadd.s32 %s50, 1
      %p54 = scmp.eq.s32.totalorder %s16, 1
      %p55 = scmp.ne.s32.totalorder %s50, %s52
      %p56 = scmp.eq.s32.totalorder %s16, 0
      %p57 = por %p55, %p56
      %p58 = scmp.ne.s32.totalorder %s50, %s52
      %p59 = scmp.eq.s32.totalorder %s21, 1
      %p60 = por %p58, %p59
      %p61 = scmp.ne.s32.totalorder %s52, %s53
      %p62 = scmp.eq.s32.totalorder %s21, 0
      %p63 = por %p61, %p62
      %p64 = scmp.ne.s32.totalorder %s52, %s53
      %p65 = scmp.eq.s32.totalorder %s22, 1
      %p66 = por %p64, %p65
      %p68 = scmp.ne.s32.totalorder %s53, %s67
      %p69 = scmp.eq.s32.totalorder %s22, 0
      %p70 = por %p68, %p69
      %s72 = sadd.s32 %s71, 1
      %p75 = scmp.eq.s32.totalorder %s16, 1
      %p76 = scmp.ne.s32.totalorder %s71, %s73
      %p77 = scmp.eq.s32.totalorder %s16, 0
      %p78 = por %p76, %p77
      %p79 = scmp.ne.s32.totalorder %s71, %s73
      %p80 = scmp.eq.s32.totalorder %s21, 1
      %p81 = por %p79, %p80
      %p82 = scmp.ne.s32.totalorder %s73, %s74
      %p83 = scmp.eq.s32.totalorder %s21, 0
      %p84 = por %p82, %p83
      %p85 = scmp.ne.s32.totalorder %s73, %s74
      %p86 = scmp.eq.s32.totalorder %s22, 1
      %p87 = por %p85, %p86
      %p89 = scmp.ne.s32.totalorder %s74, %s88
      %p90 = scmp.eq.s32.totalorder %s22, 0
      %p91 = por %p89, %p90
      %s93 = sadd.s32 %s92, 1
      %p96 = scmp.eq.s32.totalorder %s16, 1
      %p97 = scmp.ne.s32.totalorder %s92, %s94
      %p98 = scmp.eq.s32.totalorder %s16, 0
      %p99 = por %p97, %p98
      %p100 = scmp.ne.s32.totalorder %s92, %s94
      %p101 = scmp.eq.s32.totalorder %s21, 1
      %p102 = por %p100, %p101
      %p103 = scmp.ne.s32.totalorder %s94, %s95
      %p104 = scmp.eq.s32.totalorder %s21, 0
      %p105 = por %p103, %p104
      %p106 = scmp.ne.s32.totalorder %s94, %s95
      %p107 = scmp.eq.s32.totalorder %s22, 1
      %p108 = por %p106, %p107
      %p110 = scmp.ne.s32.totalorder %s95, %s109
      %p111 = scmp.eq.s32.totalorder %s22, 0
      %p112 = por %p110, %p111
      %s114 = sadd.s32 %s113, 1
      %p117 = scmp.eq.s32.totalorder %s16, 1
      %p118 = scmp.ne.s32.totalorder %s113, %s115
      %p119 = scmp.eq.s32.totalorder %s16, 0
      %p120 = por %p118, %p119
      %p121 = scmp.ne.s32.totalorder %s113, %s115
      %p122 = scmp.eq.s32.totalorder %s21, 1
      %p123 = por %p121, %p122
      %p124 = scmp.ne.s32.totalorder %s115, %s116
      %p125 = scmp.eq.s32.totalorder %s21, 0
      %p126 = por %p124, %p125
      %p127 = scmp.ne.s32.totalorder %s115, %s116
      %p128 = scmp.eq.s32.totalorder %s22, 1
      %p129 = por %p127, %p128
      %p131 = scmp.ne.s32.totalorder %s116, %s130
      %p132 = scmp.eq.s32.totalorder %s22, 0
      %p133 = por %p131, %p132
      %s135 = sadd.s32 %s134, 1
      %p138 = scmp.eq.s32.totalorder %s16, 1
      %p139 = scmp.ne.s32.totalorder %s134, %s136
      %p140 = scmp.eq.s32.totalorder %s16, 0
      %p141 = por %p139, %p140
      %p142 = scmp.ne.s32.totalorder %s134, %s136
      %p143 = scmp.eq.s32.totalorder %s21, 1
      %p144 = por %p142, %p143
      %p145 = scmp.ne.s32.totalorder %s136, %s137
      %p146 = scmp.eq.s32.totalorder %s21, 0
      %p147 = por %p145, %p146
      %p148 = scmp.ne.s32.totalorder %s136, %s137
      %p149 = scmp.eq.s32.totalorder %s22, 1
      %p150 = por %p148, %p149
      %p152 = scmp.ne.s32.totalorder %s137, %s151
      %p153 = scmp.eq.s32.totalorder %s22, 0
      %p154 = por %p152, %p153
      %s156 = sadd.s32 %s155, 1
      %p159 = scmp.eq.s32.totalorder %s16, 1
      %p160 = scmp.ne.s32.totalorder %s155, %s157
      %p161 = scmp.eq.s32.totalorder %s16, 0
      %p162 = por %p160, %p161
      %p163 = scmp.ne.s32.totalorder %s155, %s157
      %p164 = scmp.eq.s32.totalorder %s21, 1
      %p165 = por %p163, %p164
      %p166 = scmp.ne.s32.totalorder %s157, %s158
      %p167 = scmp.eq.s32.totalorder %s21, 0
      %p168 = por %p166, %p167
      %p169 = scmp.ne.s32.totalorder %s157, %s158
      %p170 = scmp.eq.s32.totalorder %s22, 1
      %p171 = por %p169, %p170
      %p173 = scmp.ne.s32.totalorder %s158, %s172
      %p174 = scmp.eq.s32.totalorder %s22, 0
      %p175 = por %p173, %p174
      %s176 = ssub.s32 %s16, %s23
      %p177 = scmp.eq.s32.totalorder %s176, 0
      %s179 = sadd.s32 %s178, 1
      %s180 = scalar_select %p177, %s178, %s179
      %p183 = pneg %p177
      %p184 = scmp.eq.s32.totalorder %s16, 1
      %p185 = por %p183, %p184
      %p186 = scmp.ne.s32.totalorder %s178, %s181
      %p187 = scmp.eq.s32.totalorder %s16, 0
      %p188 = por %p186, %p187
      %p189 = scmp.ne.s32.totalorder %s178, %s181
      %p190 = scmp.eq.s32.totalorder %s21, 1
      %p191 = por %p189, %p190
      %p192 = scmp.ne.s32.totalorder %s181, %s182
      %p193 = scmp.eq.s32.totalorder %s21, 0
      %p194 = por %p192, %p193
      %p195 = scmp.ne.s32.totalorder %s181, %s182
      %p196 = scmp.eq.s32.totalorder %s22, 1
      %p197 = por %p195, %p196
      %p199 = scmp.ne.s32.totalorder %s182, %s198
      %p200 = scmp.eq.s32.totalorder %s22, 0
      %p201 = por %p199, %p200
      %p202 = scmp.le.s32.totalorder 1, %s16
      %p203 = scmp.lt.s32.totalorder %s16, 3
      %p204 = pnand %p202, %p203
      %p205 = pneg %p204
      // Predicated region
      $region9: #{tpu_custom_call.1} parent=5 // pred_check
        _
      $region10: #{tpu_custom_call.1} parent=5 // pred_check_branch
        %207 = sbr.rel (%p204) target = $region12
      $region11: #{tpu_custom_call.1} parent=5 // pred_region
        %s208 = ssub.s32 %s16, 1
        // Predicated region
        $region13: #{tpu_custom_call.1} parent=11 // pred_check
          %p209 = pneg %p63
        $region14: #{tpu_custom_call.1} parent=11 // pred_check_branch
          %211 = sbr.rel (%p209) target = $region16
        $region15: #{tpu_custom_call.1} parent=11 // pred_region
          _
        $region16: #{tpu_custom_call.1} parent=11 // pred_fallthru
          _
        // Predicated region
        $region17: #{tpu_custom_call.1} parent=11 // pred_check
          %p212 = pneg %p84
        $region18: #{tpu_custom_call.1} parent=11 // pred_check_branch
          %214 = sbr.rel (%p212) target = $region20
        $region19: #{tpu_custom_call.1} parent=11 // pred_region
          _
        $region20: #{tpu_custom_call.1} parent=11 // pred_fallthru
          _
        // Predicated region
        $region21: #{tpu_custom_call.1} parent=11 // pred_check
          %p215 = pneg %p105
        $region22: #{tpu_custom_call.1} parent=11 // pred_check_branch
          %217 = sbr.rel (%p215) target = $region24
        $region23: #{tpu_custom_call.1} parent=11 // pred_region
          _
        $region24: #{tpu_custom_call.1} parent=11 // pred_fallthru
          _
        // Predicated region
        $region25: #{tpu_custom_call.1} parent=11 // pred_check
          %p218 = pneg %p126
        $region26: #{tpu_custom_call.1} parent=11 // pred_check_branch
          %220 = sbr.rel (%p218) target = $region28
        $region27: #{tpu_custom_call.1} parent=11 // pred_region
          _
        $region28: #{tpu_custom_call.1} parent=11 // pred_fallthru
          _
        // Predicated region
        $region29: #{tpu_custom_call.1} parent=11 // pred_check
          %p221 = pneg %p147
        $region30: #{tpu_custom_call.1} parent=11 // pred_check_branch
          %223 = sbr.rel (%p221) target = $region32
        $region31: #{tpu_custom_call.1} parent=11 // pred_region
          _
        $region32: #{tpu_custom_call.1} parent=11 // pred_fallthru
          _
        // Predicated region
        $region33: #{tpu_custom_call.1} parent=11 // pred_check
          %p224 = pneg %p168
        $region34: #{tpu_custom_call.1} parent=11 // pred_check_branch
          %226 = sbr.rel (%p224) target = $region36
        $region35: #{tpu_custom_call.1} parent=11 // pred_region
          _
        $region36: #{tpu_custom_call.1} parent=11 // pred_fallthru
          _
      $region12: #{tpu_custom_call.1} parent=5 // pred_fallthru
        _
      %p227 = scmp.lt.s32.totalorder %s16, 2
      // Predicated region
      $region37: #{tpu_custom_call.1} parent=5 // pred_check
        %p228 = pneg %p227
      $region38: #{tpu_custom_call.1} parent=5 // pred_check_branch
        %230 = sbr.rel (%p228) target = $region40
      $region39: #{tpu_custom_call.1} parent=5 // pred_region
        // Predicated region
        $region41: #{tpu_custom_call.1} parent=39 // pred_check
          %p231 = pneg %p36
        $region42: #{tpu_custom_call.1} parent=39 // pred_check_branch
          %233 = sbr.rel (%p231) target = $region44
        $region43: #{tpu_custom_call.1} parent=39 // pred_region
          %p234 = scmp.lt.s32.totalorder %s16, 1
          %s235 = scalar_select %p234, %s16, 1
          %s236 = smul.addr %s235, 2
          %s237 = smul.addr %s236, 4
          %s238 = scalar_lea.vmem %s0, %s237
        $region44: #{tpu_custom_call.1} parent=39 // pred_fallthru
          _
      $region40: #{tpu_custom_call.1} parent=5 // pred_fallthru
        _
      %p239 = scmp.le.s32.totalorder 1, %s16
      %p240 = scmp.lt.s32.totalorder %s16, 3
      %p241 = pnand %p239, %p240
      %p242 = pneg %p241
      // Predicated region
      $region45: #{tpu_custom_call.1} parent=5 // pred_check
        _
      $region46: #{tpu_custom_call.1} parent=5 // pred_check_branch
        %244 = sbr.rel (%p241) target = $region48
      $region47: #{tpu_custom_call.1} parent=5 // pred_region
        %s245 = ssub.s32 %s16, 1
        %p246 = scmp.lt.s32.totalorder %s21, 1
        %s247 = scalar_select %p246, %s21, 1
        %s248 = smul.addr %s247, 2
        %s249 = smul.addr %s248, 4
        %s250 = scalar_lea.vmem %s0, %s249
        %p251 = pneg %p42
        %p252 = pneg %p39
        %p253 = pneg %p63
        %p254 = pneg %p60
        %p255 = pneg %p84
        %p256 = pneg %p81
        %p257 = pneg %p105
        %p258 = pneg %p102
        %p259 = pneg %p126
        %p260 = pneg %p123
        %p261 = pneg %p147
        %p262 = pneg %p144
        %p263 = pneg %p168
        %p264 = pneg %p165
        %p265 = pneg %p194
        %p266 = pneg %p191
        %s267 = sand.u32 %s181, 1
        %s268 = scalar_lea.sflag [#allocation3], %s267
        %s269 = sand.u32 %s181, 1
        %s270 = smul.addr %s269, 64
        %s271 = scalar_lea.vmem [#allocation2], %s270
        %p272 = scmp.lt.s32.totalorder %s21, 1
        %s273 = scalar_select %p272, %s21, 1
        %s274 = smul.addr %s273, 2
        %s275 = smul.addr %s274, 4
        %s276 = scalar_lea.vmem %s0, %s275
        %v277 = vld [vmem:[%s1] sm:$0xff]
        %v278 = vld [vmem:[%s1 + $0x8] sm:$0xff]
        %v279 = vld [vmem:[%s1 + $0x10] sm:$0xff]
        %v280 = vld [vmem:[%s1 + $0x18] sm:$0xff]
        %v281 = vld [vmem:[%s1 + $0x20] sm:$0xff]
        %v282 = vld [vmem:[%s1 + $0x28] sm:$0xff]
        %v283 = vld [vmem:[%s2] sm:$0xff]
        %v284 = vld [vmem:[%s2 + $0x8] sm:$0xff]
        %v285 = vld [vmem:[%s2 + $0x10] sm:$0xff]
        %v286 = vld [vmem:[%s2 + $0x18] sm:$0xff]
        %v287 = vld [vmem:[%s2 + $0x20] sm:$0xff]
        %v288 = vld [vmem:[%s2 + $0x28] sm:$0xff]
        %v289 = vld [vmem:[%s3] sm:$0xff]
        %v290 = vld [vmem:[%s3 + $0x8] sm:$0xff]
        %v291 = vld [vmem:[%s3 + $0x10] sm:$0xff]
        %v292 = vld [vmem:[%s3 + $0x18] sm:$0xff]
        %v293 = vld [vmem:[%s3 + $0x20] sm:$0xff]
        %v294 = vld [vmem:[%s3 + $0x28] sm:$0xff]
        %v295 = vld [vmem:[%s3 + $0x30] sm:$0xff]
        %v296 = vld [vmem:[%s3 + $0x38] sm:$0xff]
        %v297 = vld [vmem:[%s3 + $0x40] sm:$0xff]
        %v298 = vld [vmem:[%s3 + $0x48] sm:$0xff]
        %v299 = vld [vmem:[%s3 + $0x50] sm:$0xff]
        %v300 = vld [vmem:[%s3 + $0x58] sm:$0xff]
        %v301 = vld [vmem:[%s4] sm:$0xff]
        %v302 = vld [vmem:[%s4 + $0x8] sm:$0xff]
        %v303 = vld [vmem:[%s4 + $0x10] sm:$0xff]
        %v304 = vld [vmem:[%s4 + $0x18] sm:$0xff]
        %v305 = vld [vmem:[%s4 + $0x20] sm:$0xff]
        %v306 = vld [vmem:[%s4 + $0x28] sm:$0xff]
        %v307 = vld [vmem:[%s4 + $0x30] sm:$0xff]
        %v308 = vld [vmem:[%s4 + $0x38] sm:$0xff]
        %v309 = vld [vmem:[%s4 + $0x40] sm:$0xff]
        %v310 = vld [vmem:[%s4 + $0x48] sm:$0xff]
        %v311 = vld [vmem:[%s4 + $0x50] sm:$0xff]
        %v312 = vld [vmem:[%s4 + $0x58] sm:$0xff]
        %v313 = vld [vmem:[%s5] sm:$0xff]
        %v314 = vld [vmem:[%s5 + $0x8] sm:$0xff]
        %v315 = vld [vmem:[%s5 + $0x10] sm:$0xff]
        %v316 = vld [vmem:[%s5 + $0x18] sm:$0xff]
        %v317 = vld [vmem:[%s6] sm:$0xff]
        %v318 = vld [vmem:[%s6 + $0x8] sm:$0xff]
        %v319 = vld [vmem:[%s6 + $0x10] sm:$0xff]
        %v320 = vld [vmem:[%s6 + $0x18] sm:$0xff]
        %v321 = vld [vmem:[%s276] sm:$0xff]
        %323 = vset.pattern.permute.xlu0 0
        %324 = vperm.xlu0 %323, %v283
        %v325 = vpop.permute.xlu0 %324
        %328 = vset.pattern.permute.xlu0 0
        %329 = vperm.xlu0 %328, %v284
        %v330 = vpop.permute.xlu0 %329
        %333 = vset.pattern.permute.xlu0 0
        %334 = vperm.xlu0 %333, %v285
        %v335 = vpop.permute.xlu0 %334
        %338 = vset.pattern.permute.xlu0 0
        %339 = vperm.xlu0 %338, %v286
        %v340 = vpop.permute.xlu0 %339
        %343 = vset.pattern.permute.xlu0 0
        %344 = vperm.xlu0 %343, %v287
        %v345 = vpop.permute.xlu0 %344
        %348 = vset.pattern.permute.xlu0 0
        %349 = vperm.xlu0 %348, %v288
        %v350 = vpop.permute.xlu0 %349
        %v353 = vcombine.high %v321, %v321
        %vm354 = vcmask 31744
        %v356 = vsel %vm354, %v277, 0
        %v359 = vsel %vm354, %v278, 0
        %v362 = vsel %vm354, %v279, 0
        %v365 = vsel %vm354, %v280, 0
        %v368 = vsel %vm354, %v281, 0
        %v371 = vsel %vm354, %v282, 0
        %vm373 = vcmask 1043456
        %v374 = vsel %vm373, %v321, 0
        %v376 = vsel %vm373, %v353, 0
        %378 = vmatprep.subr.mxu0 0.0
        %379 = vmatpush1.msra.mxu0 0.0
        %380 = vmatprep.subr.mxu0 0.0
        %381 = vmatpush1.msra.mxu0 0.0
        %382 = vmatprep.subr.mxu0 0.0
        %383 = vmatpush1.msra.mxu0 0.0
        %384 = vmatprep.subr.mxu0 0.0
        %385 = vmatpush1.msra.mxu0 0.0
        %386 = vmatprep.subr.mxu0 0.0
        %387 = vmatpush1.msra.mxu0 0.0
        %388 = vmatprep.subr.mxu0 0.0
        %389 = vmatpush1.msra.mxu0 0.0
        %390 = vmatprep.subr.mxu0 0.0
        %391 = vmatpush1.msra.mxu0 0.0
        %392 = vmatprep.subr.mxu0 0.0
        %393 = vmatpush1.msra.mxu0 0.0
        %394 = vmatprep.subr.mxu0 0.0
        %395 = vmatpush1.msra.mxu0 0.0
        %396 = vmatprep.subr.mxu0 0.0
        %397 = vmatpush1.msra.mxu0 0.0
        %398 = vmatprep.subr.mxu0 0.0
        %399 = vmatpush1.msra.mxu0 0.0
        %400 = vmatprep.subr.mxu0 0.0
        %401 = vmatpush1.msra.mxu0 0.0
        %402 = vmatprep.subr.mxu0 0.0
        %403 = vmatpush1.msra.mxu0 0.0
        %404 = vmatprep.subr.mxu0 0.0
        %405 = vmatpush1.msra.mxu0 0.0
        %406 = vmatprep.subr.mxu0 0.0
        %407 = vmatpush1.msra.mxu0 0.0
        %408 = vmatprep.subr.mxu0 %v376
        %409 = vmatpush1.msra.mxu0 %v374
        %410 = vmatprep.subr.mxu0 0.0
        %411 = vmatpush2.msra.mxu0 0.0
        %412 = vmatprep.subr.mxu0 0.0
        %413 = vmatpush2.msra.mxu0 0.0
        %414 = vmatprep.subr.mxu0 0.0
        %415 = vmatpush2.msra.mxu0 0.0
        %416 = vmatprep.subr.mxu0 0.0
        %417 = vmatpush2.msra.mxu0 0.0
        %418 = vmatprep.subr.mxu0 0.0
        %419 = vmatpush2.msra.mxu0 0.0
        %420 = vmatprep.subr.mxu0 0.0
        %421 = vmatpush2.msra.mxu0 0.0
        %422 = vmatprep.subr.mxu0 0.0
        %423 = vmatpush2.msra.mxu0 0.0
        %424 = vmatprep.subr.mxu0 0.0
        %425 = vmatpush2.msra.mxu0 0.0
        %426 = vmatprep.subr.mxu0 0.0
        %427 = vmatpush2.msra.mxu0 0.0
        %428 = vmatprep.subr.mxu0 0.0
        %429 = vmatpush2.msra.mxu0 0.0
        %430 = vmatprep.subr.mxu0 0.0
        %431 = vmatpush2.msra.mxu0 0.0
        %432 = vmatprep.subr.mxu0 0.0
        %433 = vmatpush2.msra.mxu0 0.0
        %434 = vmatprep.subr.mxu0 0.0
        %435 = vmatpush2.msra.mxu0 0.0
        %436 = vmatprep.subr.mxu0 0.0
        %437 = vmatpush2.msra.mxu0 0.0
        %438 = vmatprep.subr.mxu0 0.0
        %439 = vmatpush2.msra.mxu0 0.0
        %440 = vmatprep.subr.mxu0 0.0
        %441 = vmatpush2.msra.mxu0 0.0
        %442 = vmatprep.mubr.f32.mxu0 0.0
        %443 = vmatmul.mubr.f32.gmra.mxu0 %v356
        %v444 = vpop.f32.mrf.mxu0
        %v445 = vadd.f32 %v325, %v444
        %v446 = vpop.f32.mrf.mxu0
        %v447 = vadd.f32 %v325, %v446
        %448 = vmatprep.mubr.f32.mxu0 0.0
        %449 = vmatmul.mubr.f32.gmra.mxu0 %v359
        %v450 = vpop.f32.mrf.mxu0
        %v451 = vadd.f32 %v330, %v450
        %v452 = vpop.f32.mrf.mxu0
        %v453 = vadd.f32 %v330, %v452
        %454 = vmatprep.mubr.f32.mxu0 0.0
        %455 = vmatmul.mubr.f32.gmra.mxu0 %v362
        %v456 = vpop.f32.mrf.mxu0
        %v457 = vadd.f32 %v335, %v456
        %v458 = vpop.f32.mrf.mxu0
        %v459 = vadd.f32 %v335, %v458
        %460 = vmatprep.mubr.f32.mxu0 0.0
        %461 = vmatmul.mubr.f32.gmra.mxu0 %v365
        %v462 = vpop.f32.mrf.mxu0
        %v463 = vadd.f32 %v340, %v462
        %v464 = vpop.f32.mrf.mxu0
        %v465 = vadd.f32 %v340, %v464
        %466 = vmatprep.mubr.f32.mxu0 0.0
        %467 = vmatmul.mubr.f32.gmra.mxu0 %v368
        %v468 = vpop.f32.mrf.mxu0
        %v469 = vadd.f32 %v345, %v468
        %v470 = vpop.f32.mrf.mxu0
        %v471 = vadd.f32 %v345, %v470
        %472 = vmatprep.mubr.f32.mxu0 0.0
        %473 = vmatmul.mubr.f32.gmra.mxu0 %v371
        %v474 = vpop.f32.mrf.mxu0
        %v475 = vadd.f32 %v350, %v474
        %v476 = vpop.f32.mrf.mxu0
        %v477 = vadd.f32 %v350, %v476
        %478 = vdwg.mxu0
        %v479 = vmax.f32 %v469, %v471
        %480 = vmax.xlane.f32.xlu0 %v479
        %v481 = vpop.xlane.xlu0 %480
        %v482 = vmax.f32 %v475, %v477
        %483 = vmax.xlane.f32.xlu0 %v482
        %v484 = vpop.xlane.xlu0 %483
        %v485 = vsub.f32 %v469, %v481
        %v486 = vsub.f32 %v471, %v481
        %v487 = vsub.f32 %v475, %v484
        %v488 = vsub.f32 %v477, %v484
        %v489 = vmul.f32 %v485, 1.442695
        %v490 = vpow.pop %v489
        %v491 = vmul.f32 %v486, 1.442695
        %v492 = vpow.pop %v491
        %v493 = vmul.f32 %v487, 1.442695
        %v494 = vpow.pop %v493
        %v495 = vmul.f32 %v488, 1.442695
        %v496 = vpow.pop %v495
        %v497 = vadd.f32 %v490, %v492
        %498 = vadd.xlane.f32.xlu0 %v497
        %v499 = vpop.xlane.xlu0 %498
        %v500 = vadd.f32 %v494, %v496
        %501 = vadd.xlane.f32.xlu0 %v500
        %v502 = vpop.xlane.xlu0 %501
        %v503 = vrcp.pop %v499
        %v504 = vrcp.pop %v502
        %v505 = vmul.f32 %v499, %v503
        %v506 = vmul.f32 %v502, %v504
        %v507 = vsub.f32 2.0, %v505
        %v508 = vsub.f32 2.0, %v506
        %v509 = vmul.f32 %v503, %v507
        %v510 = vmul.f32 %v504, %v508
        %v511 = vmul.f32 %v490, %v509
        %v512 = vmul.f32 %v492, %v509
        %v513 = vmul.f32 %v494, %v510
        %v514 = vmul.f32 %v496, %v510
        %515 = vmatprep.subr.mxu0 0.0
        %516 = vmatpush1.xpose.msra.mxu0 0.0
        %517 = vmatprep.subr.mxu0 0.0
        %518 = vmatpush1.xpose.msra.mxu0 0.0
        %519 = vmatprep.subr.mxu0 0.0
        %520 = vmatpush1.xpose.msra.mxu0 0.0
        %521 = vmatprep.subr.mxu0 0.0
        %522 = vmatpush1.xpose.msra.mxu0 0.0
        %523 = vmatprep.subr.mxu0 0.0
        %524 = vmatpush1.xpose.msra.mxu0 0.0
        %525 = vmatprep.subr.mxu0 0.0
        %526 = vmatpush1.xpose.msra.mxu0 0.0
        %527 = vmatprep.subr.mxu0 0.0
        %528 = vmatpush1.xpose.msra.mxu0 0.0
        %529 = vmatprep.subr.mxu0 0.0
        %530 = vmatpush1.xpose.msra.mxu0 0.0
        %531 = vmatprep.subr.mxu0 0.0
        %532 = vmatpush1.xpose.msra.mxu0 0.0
        %533 = vmatprep.subr.mxu0 0.0
        %534 = vmatpush1.xpose.msra.mxu0 0.0
        %535 = vmatprep.subr.mxu0 0.0
        %536 = vmatpush1.xpose.msra.mxu0 0.0
        %537 = vmatprep.subr.mxu0 0.0
        %538 = vmatpush1.xpose.msra.mxu0 0.0
        %539 = vmatprep.subr.mxu0 0.0
        %540 = vmatpush1.xpose.msra.mxu0 0.0
        %541 = vmatprep.subr.mxu0 0.0
        %542 = vmatpush1.xpose.msra.mxu0 0.0
        %543 = vmatprep.subr.mxu0 0.0
        %544 = vmatpush1.xpose.msra.mxu0 0.0
        %545 = vmatprep.subr.mxu0 %v512
        %546 = vmatpush1.xpose.msra.mxu0 %v511
        %547 = vmatprep.subr.mxu0 0.0
        %548 = vmatpush2.xpose.msra.mxu0 0.0
        %549 = vmatprep.subr.mxu0 0.0
        %550 = vmatpush2.xpose.msra.mxu0 0.0
        %551 = vmatprep.subr.mxu0 0.0
        %552 = vmatpush2.xpose.msra.mxu0 0.0
        %553 = vmatprep.subr.mxu0 0.0
        %554 = vmatpush2.xpose.msra.mxu0 0.0
        %555 = vmatprep.subr.mxu0 0.0
        %556 = vmatpush2.xpose.msra.mxu0 0.0
        %557 = vmatprep.subr.mxu0 0.0
        %558 = vmatpush2.xpose.msra.mxu0 0.0
        %559 = vmatprep.subr.mxu0 0.0
        %560 = vmatpush2.xpose.msra.mxu0 0.0
        %561 = vmatprep.subr.mxu0 0.0
        %562 = vmatpush2.xpose.msra.mxu0 0.0
        %563 = vmatprep.subr.mxu0 0.0
        %564 = vmatpush2.xpose.msra.mxu0 0.0
        %565 = vmatprep.subr.mxu0 0.0
        %566 = vmatpush2.xpose.msra.mxu0 0.0
        %567 = vmatprep.subr.mxu0 0.0
        %568 = vmatpush2.xpose.msra.mxu0 0.0
        %569 = vmatprep.subr.mxu0 0.0
        %570 = vmatpush2.xpose.msra.mxu0 0.0
        %571 = vmatprep.subr.mxu0 0.0
        %572 = vmatpush2.xpose.msra.mxu0 0.0
        %573 = vmatprep.subr.mxu0 0.0
        %574 = vmatpush2.xpose.msra.mxu0 0.0
        %575 = vmatprep.subr.mxu0 0.0
        %576 = vmatpush2.xpose.msra.mxu0 0.0
        %577 = vmatprep.subr.mxu0 0.0
        %578 = vmatpush2.xpose.msra.mxu0 0.0
        %579 = vmatprep.mubr.f32.mxu0 %v447
        %580 = vmatmul.mubr.f32.gmra.mxu0 %v445
        %v581 = vpop.f32.mrf.mxu0
        %v582 = vadd.f32 0.0, %v581
        %v583 = vpop.f32.mrf.mxu0
        %584 = vmatprep.mubr.f32.mxu0 %v453
        %585 = vmatmul.mubr.f32.gmra.mxu0 %v451
        %v586 = vpop.f32.mrf.mxu0
        %v587 = vadd.f32 0.0, %v586
        %v588 = vpop.f32.mrf.mxu0
        %589 = vmatprep.mubr.f32.mxu0 %v459
        %590 = vmatmul.mubr.f32.gmra.mxu0 %v457
        %v591 = vpop.f32.mrf.mxu0
        %v592 = vadd.f32 0.0, %v591
        %v593 = vpop.f32.mrf.mxu0
        %594 = vmatprep.mubr.f32.mxu0 %v465
        %595 = vmatmul.mubr.f32.gmra.mxu0 %v463
        %v596 = vpop.f32.mrf.mxu0
        %v597 = vadd.f32 0.0, %v596
        %v598 = vpop.f32.mrf.mxu0
        %599 = vdwg.mxu0
        %601 = vset.pattern.permute.xlu0 0
        %602 = vperm.xlu0 %601, %v301
        %v603 = vpop.permute.xlu0 %602
        %606 = vset.pattern.permute.xlu0 0
        %607 = vperm.xlu0 %606, %v302
        %v608 = vpop.permute.xlu0 %607
        %611 = vset.pattern.permute.xlu0 0
        %612 = vperm.xlu0 %611, %v303
        %v613 = vpop.permute.xlu0 %612
        %616 = vset.pattern.permute.xlu0 0
        %617 = vperm.xlu0 %616, %v304
        %v618 = vpop.permute.xlu0 %617
        %621 = vset.pattern.permute.xlu0 0
        %622 = vperm.xlu0 %621, %v305
        %v623 = vpop.permute.xlu0 %622
        %626 = vset.pattern.permute.xlu0 0
        %627 = vperm.xlu0 %626, %v306
        %v628 = vpop.permute.xlu0 %627
        %631 = vset.pattern.permute.xlu0 0
        %632 = vperm.xlu0 %631, %v307
        %v633 = vpop.permute.xlu0 %632
        %636 = vset.pattern.permute.xlu0 0
        %637 = vperm.xlu0 %636, %v308
        %v638 = vpop.permute.xlu0 %637
        %641 = vset.pattern.permute.xlu0 0
        %642 = vperm.xlu0 %641, %v309
        %v643 = vpop.permute.xlu0 %642
        %646 = vset.pattern.permute.xlu0 0
        %647 = vperm.xlu0 %646, %v310
        %v648 = vpop.permute.xlu0 %647
        %651 = vset.pattern.permute.xlu0 0
        %652 = vperm.xlu0 %651, %v311
        %v653 = vpop.permute.xlu0 %652
        %656 = vset.pattern.permute.xlu0 0
        %657 = vperm.xlu0 %656, %v312
        %v658 = vpop.permute.xlu0 %657
        %vm660 = vcmask 261120
        %v662 = vsel %vm660, %v289, 0
        %v665 = vsel %vm660, %v290, 0
        %v668 = vsel %vm660, %v291, 0
        %v671 = vsel %vm660, %v292, 0
        %v674 = vsel %vm660, %v293, 0
        %v677 = vsel %vm660, %v294, 0
        %v680 = vsel %vm660, %v295, 0
        %v683 = vsel %vm660, %v296, 0
        %v686 = vsel %vm660, %v297, 0
        %v689 = vsel %vm660, %v298, 0
        %v692 = vsel %vm660, %v299, 0
        %v695 = vsel %vm660, %v300, 0
        %697 = vmatprep.subr.mxu0 0.0
        %698 = vmatpush1.msra.mxu0 0.0
        %699 = vmatprep.subr.mxu0 0.0
        %700 = vmatpush1.msra.mxu0 0.0
        %701 = vmatprep.subr.mxu0 0.0
        %702 = vmatpush1.msra.mxu0 0.0
        %703 = vmatprep.subr.mxu0 0.0
        %704 = vmatpush1.msra.mxu0 0.0
        %705 = vmatprep.subr.mxu0 0.0
        %706 = vmatpush1.msra.mxu0 0.0
        %707 = vmatprep.subr.mxu0 0.0
        %708 = vmatpush1.msra.mxu0 0.0
        %709 = vmatprep.subr.mxu0 0.0
        %710 = vmatpush1.msra.mxu0 0.0
        %711 = vmatprep.subr.mxu0 0.0
        %712 = vmatpush1.msra.mxu0 0.0
        %713 = vmatprep.subr.mxu0 0.0
        %714 = vmatpush1.msra.mxu0 0.0
        %715 = vmatprep.subr.mxu0 0.0
        %716 = vmatpush1.msra.mxu0 0.0
        %717 = vmatprep.subr.mxu0 0.0
        %718 = vmatpush1.msra.mxu0 0.0
        %719 = vmatprep.subr.mxu0 0.0
        %720 = vmatpush1.msra.mxu0 0.0
        %721 = vmatprep.subr.mxu0 0.0
        %722 = vmatpush1.msra.mxu0 %v597
        %723 = vmatprep.subr.mxu0 0.0
        %724 = vmatpush1.msra.mxu0 %v592
        %725 = vmatprep.subr.mxu0 0.0
        %726 = vmatpush1.msra.mxu0 %v587
        %727 = vmatprep.subr.mxu0 0.0
        %728 = vmatpush1.msra.mxu0 %v582
        %729 = vmatprep.subr.mxu0 0.0
        %730 = vmatpush2.msra.mxu0 0.0
        %731 = vmatprep.subr.mxu0 0.0
        %732 = vmatpush2.msra.mxu0 0.0
        %733 = vmatprep.subr.mxu0 0.0
        %734 = vmatpush2.msra.mxu0 0.0
        %735 = vmatprep.subr.mxu0 0.0
        %736 = vmatpush2.msra.mxu0 0.0
        %737 = vmatprep.subr.mxu0 0.0
        %738 = vmatpush2.msra.mxu0 0.0
        %739 = vmatprep.subr.mxu0 0.0
        %740 = vmatpush2.msra.mxu0 0.0
        %741 = vmatprep.subr.mxu0 0.0
        %742 = vmatpush2.msra.mxu0 0.0
        %743 = vmatprep.subr.mxu0 0.0
        %744 = vmatpush2.msra.mxu0 0.0
        %745 = vmatprep.subr.mxu0 0.0
        %746 = vmatpush2.msra.mxu0 0.0
        %747 = vmatprep.subr.mxu0 0.0
        %748 = vmatpush2.msra.mxu0 0.0
        %749 = vmatprep.subr.mxu0 0.0
        %750 = vmatpush2.msra.mxu0 0.0
        %751 = vmatprep.subr.mxu0 0.0
        %752 = vmatpush2.msra.mxu0 0.0
        %753 = vmatprep.subr.mxu0 0.0
        %754 = vmatpush2.msra.mxu0 0.0
        %755 = vmatprep.subr.mxu0 0.0
        %756 = vmatpush2.msra.mxu0 0.0
        %757 = vmatprep.subr.mxu0 0.0
        %758 = vmatpush2.msra.mxu0 0.0
        %759 = vmatprep.subr.mxu0 0.0
        %760 = vmatpush2.msra.mxu0 0.0
        %761 = vmatprep.mubr.f32.mxu0 0.0
        %762 = vmatmul.mubr.f32.gmra.mxu0 %v662
        %v763 = vpop.f32.mrf.mxu0
        %v764 = vadd.f32 %v603, %v763
        %v765 = vpop.f32.mrf.mxu0
        %766 = vmatprep.mubr.f32.mxu0 0.0
        %767 = vmatmul.mubr.f32.gmra.mxu0 %v665
        %v768 = vpop.f32.mrf.mxu0
        %v769 = vadd.f32 %v608, %v768
        %v770 = vpop.f32.mrf.mxu0
        %771 = vmatprep.mubr.f32.mxu0 0.0
        %772 = vmatmul.mubr.f32.gmra.mxu0 %v668
        %v773 = vpop.f32.mrf.mxu0
        %v774 = vadd.f32 %v613, %v773
        %v775 = vpop.f32.mrf.mxu0
        %776 = vmatprep.mubr.f32.mxu0 0.0
        %777 = vmatmul.mubr.f32.gmra.mxu0 %v671
        %v778 = vpop.f32.mrf.mxu0
        %v779 = vadd.f32 %v618, %v778
        %v780 = vpop.f32.mrf.mxu0
        %781 = vmatprep.mubr.f32.mxu0 0.0
        %782 = vmatmul.mubr.f32.gmra.mxu0 %v674
        %v783 = vpop.f32.mrf.mxu0
        %v784 = vadd.f32 %v623, %v783
        %v785 = vpop.f32.mrf.mxu0
        %786 = vmatprep.mubr.f32.mxu0 0.0
        %787 = vmatmul.mubr.f32.gmra.mxu0 %v677
        %v788 = vpop.f32.mrf.mxu0
        %v789 = vadd.f32 %v628, %v788
        %v790 = vpop.f32.mrf.mxu0
        %791 = vmatprep.mubr.f32.mxu0 0.0
        %792 = vmatmul.mubr.f32.gmra.mxu0 %v680
        %v793 = vpop.f32.mrf.mxu0
        %v794 = vadd.f32 %v633, %v793
        %v795 = vpop.f32.mrf.mxu0
        %796 = vmatprep.mubr.f32.mxu0 0.0
        %797 = vmatmul.mubr.f32.gmra.mxu0 %v683
        %v798 = vpop.f32.mrf.mxu0
        %v799 = vadd.f32 %v638, %v798
        %v800 = vpop.f32.mrf.mxu0
        %801 = vmatprep.mubr.f32.mxu0 0.0
        %802 = vmatmul.mubr.f32.gmra.mxu0 %v686
        %v803 = vpop.f32.mrf.mxu0
        %v804 = vadd.f32 %v643, %v803
        %v805 = vpop.f32.mrf.mxu0
        %806 = vmatprep.mubr.f32.mxu0 0.0
        %807 = vmatmul.mubr.f32.gmra.mxu0 %v689
        %v808 = vpop.f32.mrf.mxu0
        %v809 = vadd.f32 %v648, %v808
        %v810 = vpop.f32.mrf.mxu0
        %811 = vmatprep.mubr.f32.mxu0 0.0
        %812 = vmatmul.mubr.f32.gmra.mxu0 %v692
        %v813 = vpop.f32.mrf.mxu0
        %v814 = vadd.f32 %v653, %v813
        %v815 = vpop.f32.mrf.mxu0
        %816 = vmatprep.mubr.f32.mxu0 0.0
        %817 = vmatmul.mubr.f32.gmra.mxu0 %v695
        %v818 = vpop.f32.mrf.mxu0
        %v819 = vadd.f32 %v658, %v818
        %v820 = vpop.f32.mrf.mxu0
        %821 = vdwg.mxu0
        %822 = vxpose.xlu0.b32.start [1/16] %v764, 128
        %823 = vxpose.xlu0.b32.cont [2/16] %v769, 128
        %824 = vxpose.xlu0.b32.cont [3/16] %v774, 128
        %825 = vxpose.xlu0.b32.cont [4/16] %v779, 128
        %826 = vxpose.xlu0.b32.cont [5/16] 0.0, 128
        %827 = vxpose.xlu0.b32.cont [6/16] 0.0, 128
        %828 = vxpose.xlu0.b32.cont [7/16] 0.0, 128
        %829 = vxpose.xlu0.b32.cont [8/16] 0.0, 128
        %830 = vxpose.xlu0.b32.cont [9/16] 0.0, 128
        %831 = vxpose.xlu0.b32.cont [10/16] 0.0, 128
        %832 = vxpose.xlu0.b32.cont [11/16] 0.0, 128
        %833 = vxpose.xlu0.b32.cont [12/16] 0.0, 128
        %834 = vxpose.xlu0.b32.cont [13/16] 0.0, 128
        %835 = vxpose.xlu0.b32.cont [14/16] 0.0, 128
        %836 = vxpose.xlu0.b32.cont [15/16] 0.0, 128
        %837 = vxpose.xlu0.b32.end [16/16] 0.0, 128
        %v838 = vpop.trf.xlu0
        %v839 = vpop.trf.xlu0
        %v840 = vpop.trf.xlu0
        %v841 = vpop.trf.xlu0
        %v842 = vpop.trf.xlu0
        %v843 = vpop.trf.xlu0
        %v844 = vpop.trf.xlu0
        %v845 = vpop.trf.xlu0
        %v846 = vpop.trf.xlu0
        %v847 = vpop.trf.xlu0
        %v848 = vpop.trf.xlu0
        %v849 = vpop.trf.xlu0
        %v850 = vpop.trf.xlu0
        %v851 = vpop.trf.xlu0
        %v852 = vpop.trf.xlu0
        %v853 = vpop.trf.xlu0
        %v855 = vsel %vm660, %v838, 0
        %857 = vmatprep.subr.mxu0 0.0
        %858 = vmatpush1.msra.mxu0 0.0
        %859 = vmatprep.subr.mxu0 0.0
        %860 = vmatpush1.msra.mxu0 0.0
        %861 = vmatprep.subr.mxu0 0.0
        %862 = vmatpush1.msra.mxu0 0.0
        %863 = vmatprep.subr.mxu0 0.0
        %864 = vmatpush1.msra.mxu0 0.0
        %865 = vmatprep.subr.mxu0 0.0
        %866 = vmatpush1.msra.mxu0 0.0
        %867 = vmatprep.subr.mxu0 0.0
        %868 = vmatpush1.msra.mxu0 0.0
        %869 = vmatprep.subr.mxu0 0.0
        %870 = vmatpush1.msra.mxu0 0.0
        %871 = vmatprep.subr.mxu0 0.0
        %872 = vmatpush1.msra.mxu0 0.0
        %873 = vmatprep.subr.mxu0 0.0
        %874 = vmatpush1.msra.mxu0 0.0
        %875 = vmatprep.subr.mxu0 0.0
        %876 = vmatpush1.msra.mxu0 0.0
        %877 = vmatprep.subr.mxu0 0.0
        %878 = vmatpush1.msra.mxu0 0.0
        %879 = vmatprep.subr.mxu0 0.0
        %880 = vmatpush1.msra.mxu0 0.0
        %881 = vmatprep.subr.mxu0 0.0
        %882 = vmatpush1.msra.mxu0 %v799
        %883 = vmatprep.subr.mxu0 0.0
        %884 = vmatpush1.msra.mxu0 %v794
        %885 = vmatprep.subr.mxu0 0.0
        %886 = vmatpush1.msra.mxu0 %v789
        %887 = vmatprep.subr.mxu0 0.0
        %888 = vmatpush1.msra.mxu0 %v784
        %889 = vmatprep.subr.mxu0 0.0
        %890 = vmatpush2.msra.mxu0 0.0
        %891 = vmatprep.subr.mxu0 0.0
        %892 = vmatpush2.msra.mxu0 0.0
        %893 = vmatprep.subr.mxu0 0.0
        %894 = vmatpush2.msra.mxu0 0.0
        %895 = vmatprep.subr.mxu0 0.0
        %896 = vmatpush2.msra.mxu0 0.0
        %897 = vmatprep.subr.mxu0 0.0
        %898 = vmatpush2.msra.mxu0 0.0
        %899 = vmatprep.subr.mxu0 0.0
        %900 = vmatpush2.msra.mxu0 0.0
        %901 = vmatprep.subr.mxu0 0.0
        %902 = vmatpush2.msra.mxu0 0.0
        %903 = vmatprep.subr.mxu0 0.0
        %904 = vmatpush2.msra.mxu0 0.0
        %905 = vmatprep.subr.mxu0 0.0
        %906 = vmatpush2.msra.mxu0 0.0
        %907 = vmatprep.subr.mxu0 0.0
        %908 = vmatpush2.msra.mxu0 0.0
        %909 = vmatprep.subr.mxu0 0.0
        %910 = vmatpush2.msra.mxu0 0.0
        %911 = vmatprep.subr.mxu0 0.0
        %912 = vmatpush2.msra.mxu0 0.0
        %913 = vmatprep.subr.mxu0 0.0
        %914 = vmatpush2.msra.mxu0 0.0
        %915 = vmatprep.subr.mxu0 0.0
        %916 = vmatpush2.msra.mxu0 0.0
        %917 = vmatprep.subr.mxu0 0.0
        %918 = vmatpush2.msra.mxu0 0.0
        %919 = vmatprep.subr.mxu0 0.0
        %920 = vmatpush2.msra.mxu0 0.0
        %921 = vmatprep.mubr.f32.mxu0 0.0
        %922 = vmatmul.mubr.f32.gmra.mxu0 %v855
        %v923 = vpop.f32.mrf.mxu0
        %v924 = vadd.f32 0.0, %v923
        %v925 = vpop.f32.mrf.mxu0
        %926 = vdwg.mxu0
        %v927 = vmul.f32 %v924, 0.125
        %vm928 = vcmask 64512
        %v930 = vsel %vm928, %v804, 0
        %v933 = vsel %vm928, %v809, 0
        %v936 = vsel %vm928, %v814, 0
        %v939 = vsel %vm928, %v819, 0
        %v942 = vsel %vm928, %v927, 0
        %944 = vmatprep.subr.mxu0 0.0
        %945 = vmatpush1.xpose.msra.mxu0 0.0
        %946 = vmatprep.subr.mxu0 0.0
        %947 = vmatpush1.xpose.msra.mxu0 0.0
        %948 = vmatprep.subr.mxu0 0.0
        %949 = vmatpush1.xpose.msra.mxu0 0.0
        %950 = vmatprep.subr.mxu0 0.0
        %951 = vmatpush1.xpose.msra.mxu0 0.0
        %952 = vmatprep.subr.mxu0 0.0
        %953 = vmatpush1.xpose.msra.mxu0 0.0
        %954 = vmatprep.subr.mxu0 0.0
        %955 = vmatpush1.xpose.msra.mxu0 0.0
        %956 = vmatprep.subr.mxu0 0.0
        %957 = vmatpush1.xpose.msra.mxu0 0.0
        %958 = vmatprep.subr.mxu0 0.0
        %959 = vmatpush1.xpose.msra.mxu0 0.0
        %960 = vmatprep.subr.mxu0 0.0
        %961 = vmatpush1.xpose.msra.mxu0 0.0
        %962 = vmatprep.subr.mxu0 0.0
        %963 = vmatpush1.xpose.msra.mxu0 0.0
        %964 = vmatprep.subr.mxu0 0.0
        %965 = vmatpush1.xpose.msra.mxu0 0.0
        %966 = vmatprep.subr.mxu0 0.0
        %967 = vmatpush1.xpose.msra.mxu0 0.0
        %968 = vmatprep.subr.mxu0 0.0
        %969 = vmatpush1.xpose.msra.mxu0 0.0
        %970 = vmatprep.subr.mxu0 0.0
        %971 = vmatpush1.xpose.msra.mxu0 0.0
        %972 = vmatprep.subr.mxu0 0.0
        %973 = vmatpush1.xpose.msra.mxu0 0.0
        %974 = vmatprep.subr.mxu0 0.0
        %975 = vmatpush1.xpose.msra.mxu0 %v942
        %976 = vmatprep.subr.mxu0 0.0
        %977 = vmatpush2.xpose.msra.mxu0 0.0
        %978 = vmatprep.subr.mxu0 0.0
        %979 = vmatpush2.xpose.msra.mxu0 0.0
        %980 = vmatprep.subr.mxu0 0.0
        %981 = vmatpush2.xpose.msra.mxu0 0.0
        %982 = vmatprep.subr.mxu0 0.0
        %983 = vmatpush2.xpose.msra.mxu0 0.0
        %984 = vmatprep.subr.mxu0 0.0
        %985 = vmatpush2.xpose.msra.mxu0 0.0
        %986 = vmatprep.subr.mxu0 0.0
        %987 = vmatpush2.xpose.msra.mxu0 0.0
        %988 = vmatprep.subr.mxu0 0.0
        %989 = vmatpush2.xpose.msra.mxu0 0.0
        %990 = vmatprep.subr.mxu0 0.0
        %991 = vmatpush2.xpose.msra.mxu0 0.0
        %992 = vmatprep.subr.mxu0 0.0
        %993 = vmatpush2.xpose.msra.mxu0 0.0
        %994 = vmatprep.subr.mxu0 0.0
        %995 = vmatpush2.xpose.msra.mxu0 0.0
        %996 = vmatprep.subr.mxu0 0.0
        %997 = vmatpush2.xpose.msra.mxu0 0.0
        %998 = vmatprep.subr.mxu0 0.0
        %999 = vmatpush2.xpose.msra.mxu0 0.0
        %1000 = vmatprep.subr.mxu0 0.0
        %1001 = vmatpush2.xpose.msra.mxu0 0.0
        %1002 = vmatprep.subr.mxu0 0.0
        %1003 = vmatpush2.xpose.msra.mxu0 0.0
        %1004 = vmatprep.subr.mxu0 0.0
        %1005 = vmatpush2.xpose.msra.mxu0 0.0
        %1006 = vmatprep.subr.mxu0 0.0
        %1007 = vmatpush2.xpose.msra.mxu0 0.0
        %1008 = vmatprep.mubr.f32.mxu0 0.0
        %1009 = vmatmul.mubr.f32.gmra.mxu0 %v930
        %v1010 = vpop.f32.mrf.mxu0
        %v1011 = vadd.f32 0.0, %v1010
        %v1012 = vpop.f32.mrf.mxu0
        %1013 = vmatprep.mubr.f32.mxu0 0.0
        %1014 = vmatmul.mubr.f32.gmra.mxu0 %v933
        %v1015 = vpop.f32.mrf.mxu0
        %v1016 = vadd.f32 0.0, %v1015
        %v1017 = vpop.f32.mrf.mxu0
        %1018 = vmatprep.mubr.f32.mxu0 0.0
        %1019 = vmatmul.mubr.f32.gmra.mxu0 %v936
        %v1020 = vpop.f32.mrf.mxu0
        %v1021 = vadd.f32 0.0, %v1020
        %v1022 = vpop.f32.mrf.mxu0
        %1023 = vmatprep.mubr.f32.mxu0 0.0
        %1024 = vmatmul.mubr.f32.gmra.mxu0 %v939
        %v1025 = vpop.f32.mrf.mxu0
        %v1026 = vadd.f32 0.0, %v1025
        %v1027 = vpop.f32.mrf.mxu0
        %1028 = vdwg.mxu0
        %1030 = vset.pattern.permute.xlu0 0
        %1031 = vperm.xlu0 %1030, %v317
        %v1032 = vpop.permute.xlu0 %1031
        %1035 = vset.pattern.permute.xlu0 0
        %1036 = vperm.xlu0 %1035, %v318
        %v1037 = vpop.permute.xlu0 %1036
        %1040 = vset.pattern.permute.xlu0 0
        %1041 = vperm.xlu0 %1040, %v319
        %v1042 = vpop.permute.xlu0 %1041
        %1045 = vset.pattern.permute.xlu0 0
        %1046 = vperm.xlu0 %1045, %v320
        %v1047 = vpop.permute.xlu0 %1046
        %v1050 = vsel %vm660, %v313, 0
        %v1053 = vsel %vm660, %v314, 0
        %v1056 = vsel %vm660, %v315, 0
        %v1059 = vsel %vm660, %v316, 0
        %1061 = vmatprep.subr.mxu0 0.0
        %1062 = vmatpush1.msra.mxu0 0.0
        %1063 = vmatprep.subr.mxu0 0.0
        %1064 = vmatpush1.msra.mxu0 0.0
        %1065 = vmatprep.subr.mxu0 0.0
        %1066 = vmatpush1.msra.mxu0 0.0
        %1067 = vmatprep.subr.mxu0 0.0
        %1068 = vmatpush1.msra.mxu0 0.0
        %1069 = vmatprep.subr.mxu0 0.0
        %1070 = vmatpush1.msra.mxu0 0.0
        %1071 = vmatprep.subr.mxu0 0.0
        %1072 = vmatpush1.msra.mxu0 0.0
        %1073 = vmatprep.subr.mxu0 0.0
        %1074 = vmatpush1.msra.mxu0 0.0
        %1075 = vmatprep.subr.mxu0 0.0
        %1076 = vmatpush1.msra.mxu0 0.0
        %1077 = vmatprep.subr.mxu0 0.0
        %1078 = vmatpush1.msra.mxu0 0.0
        %1079 = vmatprep.subr.mxu0 0.0
        %1080 = vmatpush1.msra.mxu0 0.0
        %1081 = vmatprep.subr.mxu0 0.0
        %1082 = vmatpush1.msra.mxu0 0.0
        %1083 = vmatprep.subr.mxu0 0.0
        %1084 = vmatpush1.msra.mxu0 0.0
        %1085 = vmatprep.subr.mxu0 0.0
        %1086 = vmatpush1.msra.mxu0 %v1026
        %1087 = vmatprep.subr.mxu0 0.0
        %1088 = vmatpush1.msra.mxu0 %v1021
        %1089 = vmatprep.subr.mxu0 0.0
        %1090 = vmatpush1.msra.mxu0 %v1016
        %1091 = vmatprep.subr.mxu0 0.0
        %1092 = vmatpush1.msra.mxu0 %v1011
        %1093 = vmatprep.subr.mxu0 0.0
        %1094 = vmatpush2.msra.mxu0 0.0
        %1095 = vmatprep.subr.mxu0 0.0
        %1096 = vmatpush2.msra.mxu0 0.0
        %1097 = vmatprep.subr.mxu0 0.0
        %1098 = vmatpush2.msra.mxu0 0.0
        %1099 = vmatprep.subr.mxu0 0.0
        %1100 = vmatpush2.msra.mxu0 0.0
        %1101 = vmatprep.subr.mxu0 0.0
        %1102 = vmatpush2.msra.mxu0 0.0
        %1103 = vmatprep.subr.mxu0 0.0
        %1104 = vmatpush2.msra.mxu0 0.0
        %1105 = vmatprep.subr.mxu0 0.0
        %1106 = vmatpush2.msra.mxu0 0.0
        %1107 = vmatprep.subr.mxu0 0.0
        %1108 = vmatpush2.msra.mxu0 0.0
        %1109 = vmatprep.subr.mxu0 0.0
        %1110 = vmatpush2.msra.mxu0 0.0
        %1111 = vmatprep.subr.mxu0 0.0
        %1112 = vmatpush2.msra.mxu0 0.0
        %1113 = vmatprep.subr.mxu0 0.0
        %1114 = vmatpush2.msra.mxu0 0.0
        %1115 = vmatprep.subr.mxu0 0.0
        %1116 = vmatpush2.msra.mxu0 0.0
        %1117 = vmatprep.subr.mxu0 0.0
        %1118 = vmatpush2.msra.mxu0 0.0
        %1119 = vmatprep.subr.mxu0 0.0
        %1120 = vmatpush2.msra.mxu0 0.0
        %1121 = vmatprep.subr.mxu0 0.0
        %1122 = vmatpush2.msra.mxu0 0.0
        %1123 = vmatprep.subr.mxu0 0.0
        %1124 = vmatpush2.msra.mxu0 0.0
        %1125 = vmatprep.mubr.f32.mxu0 0.0
        %1126 = vmatmul.mubr.f32.gmra.mxu0 %v1050
        %v1127 = vpop.f32.mrf.mxu0
        %v1128 = vadd.f32 %v1032, %v1127
        %v1129 = vpop.f32.mrf.mxu0
        %1130 = vmatprep.mubr.f32.mxu0 0.0
        %1131 = vmatmul.mubr.f32.gmra.mxu0 %v1053
        %v1132 = vpop.f32.mrf.mxu0
        %v1133 = vadd.f32 %v1037, %v1132
        %v1134 = vpop.f32.mrf.mxu0
        %1135 = vmatprep.mubr.f32.mxu0 0.0
        %1136 = vmatmul.mubr.f32.gmra.mxu0 %v1056
        %v1137 = vpop.f32.mrf.mxu0
        %v1138 = vadd.f32 %v1042, %v1137
        %v1139 = vpop.f32.mrf.mxu0
        %1140 = vmatprep.mubr.f32.mxu0 0.0
        %1141 = vmatmul.mubr.f32.gmra.mxu0 %v1059
        %v1142 = vpop.f32.mrf.mxu0
        %v1143 = vadd.f32 %v1047, %v1142
        %v1144 = vpop.f32.mrf.mxu0
        %1145 = vdwg.mxu0
        %v1146 = vadd.f32 %v1128, %v582
        %v1147 = vadd.f32 %v1133, %v587
        %v1148 = vadd.f32 %v1138, %v592
        %v1149 = vadd.f32 %v1143, %v597
        %v1151 = vsel %vm928, %v1146, 0
        %v1154 = vsel %vm928, %v1147, 0
        %v1157 = vsel %vm928, %v1148, 0
        %v1160 = vsel %vm928, %v1149, 0
        %1162 = vmatprep.subr.mxu0 0.0
        %1163 = vmatpush1.msra.mxu0 0.0
        %1164 = vmatprep.subr.mxu0 0.0
        %1165 = vmatpush1.msra.mxu0 0.0
        %1166 = vmatprep.subr.mxu0 0.0
        %1167 = vmatpush1.msra.mxu0 0.0
        %1168 = vmatprep.subr.mxu0 0.0
        %1169 = vmatpush1.msra.mxu0 0.0
        %1170 = vmatprep.subr.mxu0 0.0
        %1171 = vmatpush1.msra.mxu0 0.0
        %1172 = vmatprep.subr.mxu0 0.0
        %1173 = vmatpush1.msra.mxu0 0.0
        %1174 = vmatprep.subr.mxu0 0.0
        %1175 = vmatpush1.msra.mxu0 0.0
        %1176 = vmatprep.subr.mxu0 0.0
        %1177 = vmatpush1.msra.mxu0 0.0
        %1178 = vmatprep.subr.mxu0 0.0
        %1179 = vmatpush1.msra.mxu0 0.0
        %1180 = vmatprep.subr.mxu0 0.0
        %1181 = vmatpush1.msra.mxu0 0.0
        %1182 = vmatprep.subr.mxu0 0.0
        %1183 = vmatpush1.msra.mxu0 0.0
        %1184 = vmatprep.subr.mxu0 0.0
        %1185 = vmatpush1.msra.mxu0 0.0
        %1186 = vmatprep.subr.mxu0 0.0
        %1187 = vmatpush1.msra.mxu0 0.0
        %1188 = vmatprep.subr.mxu0 0.0
        %1189 = vmatpush1.msra.mxu0 0.0
        %1190 = vmatprep.subr.mxu0 0.0
        %1191 = vmatpush1.msra.mxu0 0.0
        %1192 = vmatprep.subr.mxu0 %v514
        %1193 = vmatpush1.msra.mxu0 %v513
        %1194 = vmatprep.subr.mxu0 0.0
        %1195 = vmatpush2.msra.mxu0 0.0
        %1196 = vmatprep.subr.mxu0 0.0
        %1197 = vmatpush2.msra.mxu0 0.0
        %1198 = vmatprep.subr.mxu0 0.0
        %1199 = vmatpush2.msra.mxu0 0.0
        %1200 = vmatprep.subr.mxu0 0.0
        %1201 = vmatpush2.msra.mxu0 0.0
        %1202 = vmatprep.subr.mxu0 0.0
        %1203 = vmatpush2.msra.mxu0 0.0
        %1204 = vmatprep.subr.mxu0 0.0
        %1205 = vmatpush2.msra.mxu0 0.0
        %1206 = vmatprep.subr.mxu0 0.0
        %1207 = vmatpush2.msra.mxu0 0.0
        %1208 = vmatprep.subr.mxu0 0.0
        %1209 = vmatpush2.msra.mxu0 0.0
        %1210 = vmatprep.subr.mxu0 0.0
        %1211 = vmatpush2.msra.mxu0 0.0
        %1212 = vmatprep.subr.mxu0 0.0
        %1213 = vmatpush2.msra.mxu0 0.0
        %1214 = vmatprep.subr.mxu0 0.0
        %1215 = vmatpush2.msra.mxu0 0.0
        %1216 = vmatprep.subr.mxu0 0.0
        %1217 = vmatpush2.msra.mxu0 0.0
        %1218 = vmatprep.subr.mxu0 0.0
        %1219 = vmatpush2.msra.mxu0 0.0
        %1220 = vmatprep.subr.mxu0 0.0
        %1221 = vmatpush2.msra.mxu0 0.0
        %1222 = vmatprep.subr.mxu0 0.0
        %1223 = vmatpush2.msra.mxu0 0.0
        %1224 = vmatprep.subr.mxu0 0.0
        %1225 = vmatpush2.msra.mxu0 0.0
        %1226 = vmatprep.mubr.f32.mxu0 0.0
        %1227 = vmatmul.mubr.f32.gmra.mxu0 %v1151
        %v1228 = vpop.f32.mrf.mxu0
        %v1229 = vadd.f32 0.0, %v1228
        %v1230 = vpop.f32.mrf.mxu0
        %v1231 = vadd.f32 0.0, %v1230
        %1232 = vmatprep.mubr.f32.mxu0 0.0
        %1233 = vmatmul.mubr.f32.gmra.mxu0 %v1154
        %v1234 = vpop.f32.mrf.mxu0
        %v1235 = vadd.f32 0.0, %v1234
        %v1236 = vpop.f32.mrf.mxu0
        %v1237 = vadd.f32 0.0, %v1236
        %1238 = vmatprep.mubr.f32.mxu0 0.0
        %1239 = vmatmul.mubr.f32.gmra.mxu0 %v1157
        %v1240 = vpop.f32.mrf.mxu0
        %v1241 = vadd.f32 0.0, %v1240
        %v1242 = vpop.f32.mrf.mxu0
        %v1243 = vadd.f32 0.0, %v1242
        %1244 = vmatprep.mubr.f32.mxu0 0.0
        %1245 = vmatmul.mubr.f32.gmra.mxu0 %v1160
        %v1246 = vpop.f32.mrf.mxu0
        %v1247 = vadd.f32 0.0, %v1246
        %v1248 = vpop.f32.mrf.mxu0
        %v1249 = vadd.f32 0.0, %v1248
        %1250 = vdwg.mxu0
        %1251 = vst [vmem:[%s271] sm:$0xff] %v1229
        %1252 = vst [vmem:[%s271 + $0x8] sm:$0xff] %v1231
        %1253 = vst [vmem:[%s271 + $0x10] sm:$0xff] %v1235
        %1254 = vst [vmem:[%s271 + $0x18] sm:$0xff] %v1237
        %1255 = vst [vmem:[%s271 + $0x20] sm:$0xff] %v1241
        %1256 = vst [vmem:[%s271 + $0x28] sm:$0xff] %v1243
        %1257 = vst [vmem:[%s271 + $0x30] sm:$0xff] %v1247
        %1258 = vst [vmem:[%s271 + $0x38] sm:$0xff] %v1249
        %s1259 = sand.u32 %s181, 1
        %s1260 = scalar_lea.sflag [#allocation3], %s1259
        %s1261 = sand.u32 %s181, 1
        %s1262 = smul.addr %s1261, 64
        %s1263 = scalar_lea.vmem [#allocation2], %s1262
        // Predicated region
        $region49: #{tpu_custom_call.1} parent=47 // pred_check
          %p1264 = pneg %p191
        $region50: #{tpu_custom_call.1} parent=47 // pred_check_branch
          %1266 = sbr.rel (%p1264) target = $region52
        $region51: #{tpu_custom_call.1} parent=47 // pred_region
          %s1268 = ssub.s32 1024, 1024
          %1269 = vsyncadd %s1260, %s1268
          %s1270 = smul.addr %s21, 8
          %s1271 = smul.addr %s1270, 128
          %s1272 = scalar_lea.hbm %s7, %s1271
          %s1273 = sshll.u32 %s1263, 4
          %s1274 = int_to_ptr.vmem [resolvable:$true] %s1273
          %1279 = dma.vmem_to_hbm [thread:$0]  %s1274, 1024, %s1272, %s1260, 256, 256, 16
        $region52: #{tpu_custom_call.1} parent=47 // pred_fallthru
          _
      $region48: #{tpu_custom_call.1} parent=5 // pred_fallthru
        _
      %p1280 = scmp.le.s32.totalorder 2, %s16
      // Predicated region
      $region53: #{tpu_custom_call.1} parent=5 // pred_check
        %p1281 = pneg %p1280
      $region54: #{tpu_custom_call.1} parent=5 // pred_check_branch
        %1283 = sbr.rel (%p1281) target = $region56
      $region55: #{tpu_custom_call.1} parent=5 // pred_region
        %s1284 = ssub.s32 %s16, 2
        // Predicated region
        $region57: #{tpu_custom_call.1} parent=55 // pred_check
          %p1285 = pneg %p197
        $region58: #{tpu_custom_call.1} parent=55 // pred_check_branch
          %1287 = sbr.rel (%p1285) target = $region60
        $region59: #{tpu_custom_call.1} parent=55 // pred_region
          %s1288 = sand.u32 %s182, 1
          %s1289 = scalar_lea.sflag [#allocation3], %s1288
          %s1290 = sand.u32 %s182, 1
          %s1291 = smul.addr %s1290, 64
          %s1292 = scalar_lea.vmem [#allocation2], %s1291
          %1293 = dma.done %s1289, 1024
        $region60: #{tpu_custom_call.1} parent=55 // pred_fallthru
          _
      $region56: #{tpu_custom_call.1} parent=5 // pred_fallthru
        _
    $region6: #{tpu_custom_call.1} parent=1 // loop_footer
      %s20 = sadd.s32 1, %s16
    $region7: #{tpu_custom_call.1} parent=1 // loop_footer_branch
      %15 = sbr.rel target = $region3
    $region8: #{tpu_custom_call.1} parent=1 // loop_exit
      _
    %1294 = vsyncpa [#allocation3], 1
    %s1295 = scalar_lea.sflag [#allocation3], 1
    %1296 = vsyncpa %s1295, 1

</llo_original>
